<compile_context>
chip_gen: v5e
topology: v5e:2x2
jax: 0.10.0
libtpu: 0.0.40
codegen_flags: <defaults>
</compile_context>

<pallas_src>
import functools

import jax
import jax.numpy as jnp
from jax.experimental import pallas as pl
from jax.experimental.pallas import tpu as pltpu


# ---------------------------------------------------------------------------
# Kernel 1: per-channel sum / sum-of-squares.
#   grid = (hw_chunks [parallel], N [arbitrary, accumulated into resident block])
# ---------------------------------------------------------------------------
def _stats_kernel(x_ref, sum_ref, sq_ref):
    @pl.when(pl.program_id(1) == 0)
    def _():
        sum_ref[...] = jnp.zeros_like(sum_ref)
        sq_ref[...] = jnp.zeros_like(sq_ref)

    x = x_ref[...].astype(jnp.float32)               # (1, C, hw_tile)
    sum_ref[...] += jnp.sum(x, axis=-1, keepdims=True)
    sq_ref[...] += jnp.sum(x * x, axis=-1, keepdims=True)


# ---------------------------------------------------------------------------
# Kernel 2: folded normalization + 1x1 conv:  out = W' @ x + b'
# ---------------------------------------------------------------------------
def _conv_kernel(w_ref, b_ref, x_ref, o_ref, *, use_mxu):
    x = x_ref[0].astype(jnp.float32)                 # (C_in, hw_tile)
    w = w_ref[...]                                   # (C_out, C_in), folded, f32
    b = b_ref[...]                                   # (C_out, 1),   folded, f32
    if use_mxu:
        out = jnp.dot(w, x, preferred_element_type=jnp.float32) + b
    else:
        # Tiny C: a (C,C)x(C,hw) matmul is <1% MXU utilization; broadcast-FMA on the VPU.
        out = jnp.broadcast_to(b, (w.shape[0], x.shape[1]))
        for c in range(w.shape[1]):                  # static, unrolled (C <= 32)
            out = out + w[:, c:c + 1] * x[c:c + 1, :]
    o_ref[0] = out.astype(o_ref.dtype)


def _pick_hw_tile(hw, c, itemsize, target_bytes=1 << 20):
    """Largest multiple-of-128 divisor of hw with a (C, tile) block near target_bytes."""
    if hw % 128 != 0:
        return hw                                     # single full-extent block
    max_lanes = max(128, (target_bytes // max(1, c * itemsize)) // 128 * 128)
    best, lanes = 128, 128
    limit = min(hw, max_lanes)
    while lanes <= limit:
        if hw % lanes == 0:
            best = lanes
        lanes += 128
    return best


@functools.partial(jax.jit, static_argnames=("eps",))
def conditional_norm_forward(x_nchw, weight, bias, *, eps=1e-5):
    """x_nchw: (N, C, H, W); weight: (C_out, C_in) from conv (C,C,1,1); bias: (C_out,)."""
    N, C, H, W = x_nchw.shape
    HW = H * W
    M = N * HW

    x3 = x_nchw.reshape(N, C, HW)                    # contiguous view, no transpose
    elem = max(4, x_nchw.dtype.itemsize)
    hw_tile = _pick_hw_tile(HW, C, elem)
    n_hw = HW // hw_tile

    # VMEM budget: double-buffered x/out tiles + folded weight/bias + headroom.
    tile_bytes = C * hw_tile * elem
    vmem_limit = int(min(48 << 20,
                         max(16 << 20, 6 * tile_bytes + (C * C + 4 * C) * 4 + (2 << 20))))
    cparams_stats = pltpu.CompilerParams(
        dimension_semantics=("parallel", "arbitrary"),
        vmem_limit_bytes=vmem_limit,
    )
    cparams_conv = pltpu.CompilerParams(
        dimension_semantics=("parallel", "parallel"),
        vmem_limit_bytes=vmem_limit,
    )

    # ---- pass 1: batch statistics (per-hw-chunk partials, accumulated over N) ----
    part_sum, part_sq = pl.pallas_call(
        _stats_kernel,
        out_shape=(
            jax.ShapeDtypeStruct((n_hw, C, 1), jnp.float32),
            jax.ShapeDtypeStruct((n_hw, C, 1), jnp.float32),
        ),
        grid=(n_hw, N),
        in_specs=[pl.BlockSpec((1, C, hw_tile), lambda j, n: (n, 0, j))],
        out_specs=(
            pl.BlockSpec((1, C, 1), lambda j, n: (j, 0, 0)),
            pl.BlockSpec((1, C, 1), lambda j, n: (j, 0, 0)),
        ),
        compiler_params=cparams_stats,
    )(x3)

    sums = jnp.sum(part_sum, axis=(0, 2))            # (C,)
    sqs = jnp.sum(part_sq, axis=(0, 2))              # (C,)
    mean = sums / M
    var = jnp.maximum(sqs / M - mean * mean, 0.0)    # biased variance (BN training norm)
    inv_std = jax.lax.rsqrt(var + eps)

    # ---- fold normalization into the 1x1 conv (plain JAX, negligible) ----
    w_f = weight.astype(jnp.float32) * inv_std[None, :]     # (C_out, C_in)
    b_f = (bias.astype(jnp.float32) - w_f @ mean).reshape(C, 1)

    conv_kernel = functools.partial(_conv_kernel, use_mxu=(C > 32))

    # ---- pass 2: out = W' @ x + b' over (C, hw_tile) tiles ----
    out3 = pl.pallas_call(
        conv_kernel,
        out_shape=jax.ShapeDtypeStruct((N, C, HW), x_nchw.dtype),
        grid=(N, n_hw),
        in_specs=[
            pl.BlockSpec((C, C), lambda n, j: (0, 0)),        # folded weight
            pl.BlockSpec((C, 1), lambda n, j: (0, 0)),        # folded bias
            pl.BlockSpec((1, C, hw_tile), lambda n, j: (n, 0, j)),
        ],
        out_specs=pl.BlockSpec((1, C, hw_tile), lambda n, j: (n, 0, j)),
        compiler_params=cparams_conv,
    )(w_f, b_f, x3)

    return out3.reshape(N, C, H, W)


# ---------------------------------------------------------------------------
# Parameter init (deterministic, mimics Conv2d kaiming-uniform-ish bounds).
# ---------------------------------------------------------------------------
def init_conditional_norm_params(key, norm_nc, task_dict):
    params = {}
    for task in task_dict.keys():
        key, kw, kb = jax.random.split(key, 3)
        fan_in = norm_nc * 1 * 1
        bound_w = (6.0 / fan_in) ** 0.5              # kaiming_uniform(a=sqrt(5)) bound
        bound_b = 1.0 / (fan_in ** 0.5)
        w = jax.random.uniform(kw, (norm_nc, norm_nc), jnp.float32, -bound_w, bound_w)
        b = jax.random.uniform(kb, (norm_nc,), jnp.float32, -bound_b, bound_b)
        params[task] = (w, b)
    return params


def reference_forward(x_nchw, weight, bias, eps=1e-5):
    # pure-JAX reference for sanity check
    mean = jnp.mean(x_nchw, axis=(0, 2, 3), keepdims=True)
    var = jnp.mean((x_nchw - mean) ** 2, axis=(0, 2, 3), keepdims=True)
    normalized = (x_nchw - mean) / jnp.sqrt(var + eps)
    out = jnp.einsum("nchw,oc->nohw", normalized, weight)
    return out + bias.reshape(1, -1, 1, 1)


if __name__ == "__main__":
    key = jax.random.PRNGKey(0)
    kx, kp = jax.random.split(key)

    N, C, H, W = 2, 4, 16, 16                        # small shapes consistent with the module
    task_dict = {"taskA": None, "taskB": None}

    x = jax.random.normal(kx, (N, C, H, W), jnp.float32)
    params = init_conditional_norm_params(kp, C, task_dict)

    task_name = "taskA"
    w, b = params[task_name]

    out = conditional_norm_forward(x, w, b)
    out = jax.block_until_ready(out)

    ref = reference_forward(x, w, b)
    assert out.shape == (N, C, H, W)
    assert jnp.allclose(out, ref, atol=1e-4, rtol=1e-4), "mismatch vs reference"

    print("KERNEL_OK")
</pallas_src>

<mosaic_0001>
module attributes {stable_mosaic.version = 11 : i64} {
  func.func @_stats_kernel(%arg0: i32, %arg1: i32, %arg2: memref<1x4x256xf32, #tpu.memory_space<vmem>>, %arg3: memref<1x4x1xf32, #tpu.memory_space<vmem>>, %arg4: memref<1x4x1xf32, #tpu.memory_space<vmem>>) attributes {dimension_semantics = [#tpu.dimension_semantics<parallel>, #tpu.dimension_semantics<arbitrary>], iteration_bounds = array<i64: 1, 2>, scalar_prefetch = 0 : i64, scratch_operands = 0 : i64, tpu.core_type = #tpu.core_type<tc>, window_params = [{transform_indices = @transform_0, window_bounds = array<i64: 1, 4, 256>}, {transform_indices = @transform_1, window_bounds = array<i64: 1, 4, 1>}, {transform_indices = @transform_2, window_bounds = array<i64: 1, 4, 1>}]} {
    %c0_i32 = arith.constant 0 : i32
    %0 = arith.cmpi eq, %arg1, %c0_i32 : i32
    %1 = arith.extui %0 : i1 to i32
    %c0_i32_0 = arith.constant 0 : i32
    %2 = arith.cmpi ne, %1, %c0_i32_0 : i32
    scf.if %2 {
      %cst_16 = arith.constant 0.000000e+00 : f32
      %15 = vector.broadcast %cst_16 : f32 to vector<1x4x1xf32>
      %c0_17 = arith.constant 0 : index
      %c0_18 = arith.constant 0 : index
      %c0_19 = arith.constant 0 : index
      %16 = vector.load %arg3[%c0_17, %c0_18, %c0_19] : memref<1x4x1xf32, #tpu.memory_space<vmem>>, vector<1x4x1xf32>
      tpu.vector_store %arg3[%c0_17, %c0_18, %c0_19], %15 {strides = array<i32>} : memref<1x4x1xf32, #tpu.memory_space<vmem>>, vector<1x4x1xf32>,
      %cst_20 = arith.constant 0.000000e+00 : f32
      %17 = vector.broadcast %cst_20 : f32 to vector<1x4x1xf32>
      %c0_21 = arith.constant 0 : index
      %c0_22 = arith.constant 0 : index
      %c0_23 = arith.constant 0 : index
      %18 = vector.load %arg4[%c0_21, %c0_22, %c0_23] : memref<1x4x1xf32, #tpu.memory_space<vmem>>, vector<1x4x1xf32>
      tpu.vector_store %arg4[%c0_21, %c0_22, %c0_23], %17 {strides = array<i32>} : memref<1x4x1xf32, #tpu.memory_space<vmem>>, vector<1x4x1xf32>,
    } else {
    }
    %c0 = arith.constant 0 : index
    %c0_1 = arith.constant 0 : index
    %c0_2 = arith.constant 0 : index
    %3 = vector.load %arg2[%c0, %c0_1, %c0_2] : memref<1x4x256xf32, #tpu.memory_space<vmem>>, vector<1x4x256xf32>
    %c0_3 = arith.constant 0 : index
    %c0_4 = arith.constant 0 : index
    %c0_5 = arith.constant 0 : index
    %4 = vector.load %arg3[%c0_3, %c0_4, %c0_5] : memref<1x4x1xf32, #tpu.memory_space<vmem>>, vector<1x4x1xf32>
    %cst = arith.constant dense<0.000000e+00> : vector<1x4xf32>
    %5 = vector.multi_reduction <add>, %3, %cst [2] : vector<1x4x256xf32> to vector<1x4xf32>
    %6 = vector.shape_cast %5 : vector<1x4xf32> to vector<1x4x1xf32>
    %7 = arith.addf %4, %6 : vector<1x4x1xf32>
    %c0_6 = arith.constant 0 : index
    %c0_7 = arith.constant 0 : index
    %c0_8 = arith.constant 0 : index
    %8 = vector.load %arg3[%c0_6, %c0_7, %c0_8] : memref<1x4x1xf32, #tpu.memory_space<vmem>>, vector<1x4x1xf32>
    tpu.vector_store %arg3[%c0_6, %c0_7, %c0_8], %7 {strides = array<i32>} : memref<1x4x1xf32, #tpu.memory_space<vmem>>, vector<1x4x1xf32>,
    %c0_9 = arith.constant 0 : index
    %c0_10 = arith.constant 0 : index
    %c0_11 = arith.constant 0 : index
    %9 = vector.load %arg4[%c0_9, %c0_10, %c0_11] : memref<1x4x1xf32, #tpu.memory_space<vmem>>, vector<1x4x1xf32>
    %10 = arith.mulf %3, %3 : vector<1x4x256xf32>
    %cst_12 = arith.constant dense<0.000000e+00> : vector<1x4xf32>
    %11 = vector.multi_reduction <add>, %10, %cst_12 [2] : vector<1x4x256xf32> to vector<1x4xf32>
    %12 = vector.shape_cast %11 : vector<1x4xf32> to vector<1x4x1xf32>
    %13 = arith.addf %9, %12 : vector<1x4x1xf32>
    %c0_13 = arith.constant 0 : index
    %c0_14 = arith.constant 0 : index
    %c0_15 = arith.constant 0 : index
    %14 = vector.load %arg4[%c0_13, %c0_14, %c0_15] : memref<1x4x1xf32, #tpu.memory_space<vmem>>, vector<1x4x1xf32>
    tpu.vector_store %arg4[%c0_13, %c0_14, %c0_15], %13 {strides = array<i32>} : memref<1x4x1xf32, #tpu.memory_space<vmem>>, vector<1x4x1xf32>,
    return
  }
  func.func @transform_0(%arg0: i32, %arg1: i32) -> (i32, i32, i32) {
    %c0_i32 = arith.constant 0 : i32
    %c0_i32_0 = arith.constant 0 : i32
    return %arg1, %c0_i32, %arg0 : i32, i32, i32
  }
  func.func @transform_1(%arg0: i32, %arg1: i32) -> (i32, i32, i32) {
    %c0_i32 = arith.constant 0 : i32
    %c0_i32_0 = arith.constant 0 : i32
    %c0_i32_1 = arith.constant 0 : i32
    return %arg0, %c0_i32, %c0_i32_0 : i32, i32, i32
  }
  func.func @transform_2(%arg0: i32, %arg1: i32) -> (i32, i32, i32) {
    %c0_i32 = arith.constant 0 : i32
    %c0_i32_0 = arith.constant 0 : i32
    %c0_i32_1 = arith.constant 0 : i32
    return %arg0, %c0_i32, %c0_i32_0 : i32, i32, i32
  }
}

module attributes {stable_mosaic.version = 11 : i64} {
  func.func @_conv_kernel(%arg0: i32, %arg1: i32, %arg2: memref<4x4xf32, #tpu.memory_space<vmem>>, %arg3: memref<4x1xf32, #tpu.memory_space<vmem>>, %arg4: memref<1x4x256xf32, #tpu.memory_space<vmem>>, %arg5: memref<1x4x256xf32, #tpu.memory_space<vmem>>) attributes {dimension_semantics = [#tpu.dimension_semantics<parallel>, #tpu.dimension_semantics<parallel>], iteration_bounds = array<i64: 2, 1>, scalar_prefetch = 0 : i64, scratch_operands = 0 : i64, tpu.core_type = #tpu.core_type<tc>, window_params = [{pipeline_mode = #tpu.pipeline_mode<synchronous>, transform_indices = @transform_0, window_bounds = array<i64: 4, 4>}, {pipeline_mode = #tpu.pipeline_mode<synchronous>, transform_indices = @transform_1, window_bounds = array<i64: 4, 1>}, {transform_indices = @transform_2, window_bounds = array<i64: 1, 4, 256>}, {transform_indices = @transform_3, window_bounds = array<i64: 1, 4, 256>}]} {
    %c0 = arith.constant 0 : index
    %c0_0 = arith.constant 0 : index
    %c0_1 = arith.constant 0 : index
    %0 = vector.load %arg4[%c0, %c0_0, %c0_1] : memref<1x4x256xf32, #tpu.memory_space<vmem>>, vector<1x4x256xf32>
    %1 = vector.shape_cast %0 : vector<1x4x256xf32> to vector<4x256xf32>
    %c0_2 = arith.constant 0 : index
    %c0_3 = arith.constant 0 : index
    %2 = vector.load %arg2[%c0_2, %c0_3] : memref<4x4xf32, #tpu.memory_space<vmem>>, vector<4x4xf32>
    %c0_4 = arith.constant 0 : index
    %c0_5 = arith.constant 0 : index
    %3 = vector.load %arg3[%c0_4, %c0_5] : memref<4x1xf32, #tpu.memory_space<vmem>>, vector<4x1xf32>
    %4 = vector.shape_cast %3 : vector<4x1xf32> to vector<4x1xf32>
    %5 = vector.broadcast %4 : vector<4x1xf32> to vector<4x256xf32>
    %6 = vector.extract_strided_slice %2 {offsets = [0, 0], sizes = [4, 1], strides = [1, 1]} : vector<4x4xf32> to vector<4x1xf32>
    %7 = vector.extract_strided_slice %1 {offsets = [0, 0], sizes = [1, 256], strides = [1, 1]} : vector<4x256xf32> to vector<1x256xf32>
    %8 = vector.broadcast %6 : vector<4x1xf32> to vector<4x256xf32>
    %9 = vector.broadcast %7 : vector<1x256xf32> to vector<4x256xf32>
    %10 = arith.mulf %8, %9 : vector<4x256xf32>
    %11 = arith.addf %5, %10 : vector<4x256xf32>
    %12 = vector.extract_strided_slice %2 {offsets = [0, 1], sizes = [4, 1], strides = [1, 1]} : vector<4x4xf32> to vector<4x1xf32>
    %13 = vector.extract_strided_slice %1 {offsets = [1, 0], sizes = [1, 256], strides = [1, 1]} : vector<4x256xf32> to vector<1x256xf32>
    %14 = vector.broadcast %12 : vector<4x1xf32> to vector<4x256xf32>
    %15 = vector.broadcast %13 : vector<1x256xf32> to vector<4x256xf32>
    %16 = arith.mulf %14, %15 : vector<4x256xf32>
    %17 = arith.addf %11, %16 : vector<4x256xf32>
    %18 = vector.extract_strided_slice %2 {offsets = [0, 2], sizes = [4, 1], strides = [1, 1]} : vector<4x4xf32> to vector<4x1xf32>
    %19 = vector.extract_strided_slice %1 {offsets = [2, 0], sizes = [1, 256], strides = [1, 1]} : vector<4x256xf32> to vector<1x256xf32>
    %20 = vector.broadcast %18 : vector<4x1xf32> to vector<4x256xf32>
    %21 = vector.broadcast %19 : vector<1x256xf32> to vector<4x256xf32>
    %22 = arith.mulf %20, %21 : vector<4x256xf32>
    %23 = arith.addf %17, %22 : vector<4x256xf32>
    %24 = vector.extract_strided_slice %2 {offsets = [0, 3], sizes = [4, 1], strides = [1, 1]} : vector<4x4xf32> to vector<4x1xf32>
    %25 = vector.extract_strided_slice %1 {offsets = [3, 0], sizes = [1, 256], strides = [1, 1]} : vector<4x256xf32> to vector<1x256xf32>
    %26 = vector.broadcast %24 : vector<4x1xf32> to vector<4x256xf32>
    %27 = vector.broadcast %25 : vector<1x256xf32> to vector<4x256xf32>
    %28 = arith.mulf %26, %27 : vector<4x256xf32>
    %29 = arith.addf %23, %28 : vector<4x256xf32>
    %c0_6 = arith.constant 0 : index
    %c0_7 = arith.constant 0 : index
    %c0_8 = arith.constant 0 : index
    %30 = vector.load %arg5[%c0_6, %c0_7, %c0_8] : memref<1x4x256xf32, #tpu.memory_space<vmem>>, vector<1x4x256xf32>
    %31 = vector.shape_cast %30 : vector<1x4x256xf32> to vector<4x256xf32>
    %32 = vector.shape_cast %29 : vector<4x256xf32> to vector<1x4x256xf32>
    tpu.vector_store %arg5[%c0_6, %c0_7, %c0_8], %32 {strides = array<i32>} : memref<1x4x256xf32, #tpu.memory_space<vmem>>, vector<1x4x256xf32>,
    return
  }
  func.func @transform_0(%arg0: i32, %arg1: i32) -> (i32, i32) {
    %c0_i32 = arith.constant 0 : i32
    %c0_i32_0 = arith.constant 0 : i32
    %c0_i32_1 = arith.constant 0 : i32
    return %c0_i32, %c0_i32_0 : i32, i32
  }
  func.func @transform_1(%arg0: i32, %arg1: i32) -> (i32, i32) {
    %c0_i32 = arith.constant 0 : i32
    %c0_i32_0 = arith.constant 0 : i32
    %c0_i32_1 = arith.constant 0 : i32
    return %c0_i32, %c0_i32_0 : i32, i32
  }
  func.func @transform_2(%arg0: i32, %arg1: i32) -> (i32, i32, i32) {
    %c0_i32 = arith.constant 0 : i32
    %c0_i32_0 = arith.constant 0 : i32
    return %arg0, %c0_i32, %arg1 : i32, i32, i32
  }
  func.func @transform_3(%arg0: i32, %arg1: i32) -> (i32, i32, i32) {
    %c0_i32 = arith.constant 0 : i32
    %c0_i32_0 = arith.constant 0 : i32
    return %arg0, %c0_i32, %arg1 : i32, i32, i32
  }
}

</mosaic_0001>

<llo_original>
// kernel: conditional_norm_forward.2
$region0: #{conditional_norm_forward.2}
  #allocation0 [shape = 'u32[]', space=smem, size = 0x4, offset = 0x4, fixed_abs, tag = 'smem constant byte address 0x4 - core index']
  #allocation1 [shape = 'u32[72,128]{1,0:T(1,128)}', space=vmem, size = 0x9000, scoped, tag = 'internal scratch']
  %s0 = inlined_call_operand.vmem [shape: f32[2,4,256], index: 0, kind: input, shape index: {}]
  %s1 = inlined_call_operand.vmem [shape: f32[1,4,1], index: 1, kind: output, shape index: {0}]
  %s2 = inlined_call_operand.vmem [shape: f32[1,4,1], index: 2, kind: output, shape index: {1}]
  %3 = xla_tuple %s1, %s2
  %s4 = sld [smem:[#allocation0]]
  $region49: #{conditional_norm_forward.2} parent=0
    _
  %s6 = ssub.s32 1, %s4
  %s7 = scalar_select 0, %s6, %s4
  loop: start=0, step=1, limit=4
  $region2: #{conditional_norm_forward.2} parent=0 // loop_pre_header
    _
  $region3: #{conditional_norm_forward.2} parent=0 // loop_header
    %s9 = sphi 0, %s13
    %p10 = scmp.ge.s32.totalorder %s9, 4
    %s16 = sphi 0, %s28
    %s17 = sphi 0, %s24
    %s18 = sphi 0, %s16
    %s19 = sphi 0, %s17
    %s20 = sphi 0, %s18
    %s21 = sphi 0, %s19
    %s33 = sphi 0, %s35
    %s36 = sphi 0, %s33
    %s37 = sphi 0, %s36
    %s53 = sphi 0, %s37
    %s59 = sphi 0, %s61
    %s62 = sphi 0, %s59
    %s63 = sphi 0, %s62
    %s79 = sphi 0, %s63
    %s85 = sphi 0, %s87
    %s88 = sphi 0, %s85
    %s89 = sphi 0, %s88
    %s105 = sphi 0, %s89
  $region4: #{conditional_norm_forward.2} parent=0 // loop_header_branch
    %12 = sbr.rel (%p10) target = $region8
  $region5: #{conditional_norm_forward.2} parent=0 // loop_body
    %s14 = ssub.s32 %s9, 1
    %s15 = ssub.s32 %s9, 2
    %s22 = sadd.s32 1, %s17
    %p23 = scmp.ge.s32.totalorder %s22, 2
    %s24 = scalar_select %p23, 0, %s22
    %s25 = sadd.s32 1, %s16
    %s26 = scalar_select %p23, %s25, %s16
    %p27 = scmp.ge.s32.totalorder %s26, 1
    %s28 = scalar_select %p27, 0, %s26
    %s29 = ssub.s32 %s17, %s24
    %s30 = ssub.s32 %s16, %s28
    %s31 = sor.u32 %s29, %s30
    %p32 = scmp.eq.s32.totalorder %s31, 0
    %s34 = sadd.s32 %s33, 1
    %s35 = scalar_select %p32, %s33, %s34
    %p38 = pneg %p32
    %p39 = scmp.eq.s32.totalorder %s9, 1
    %p40 = por %p38, %p39
    %p41 = scmp.ne.s32.totalorder %s33, %s36
    %p42 = scmp.eq.s32.totalorder %s9, 0
    %p43 = por %p41, %p42
    %p44 = scmp.ne.s32.totalorder %s33, %s36
    %p45 = scmp.eq.s32.totalorder %s14, 1
    %p46 = por %p44, %p45
    %p47 = scmp.ne.s32.totalorder %s36, %s37
    %p48 = scmp.eq.s32.totalorder %s14, 0
    %p49 = por %p47, %p48
    %p50 = scmp.ne.s32.totalorder %s36, %s37
    %p51 = scmp.eq.s32.totalorder %s15, 1
    %p52 = por %p50, %p51
    %p54 = scmp.ne.s32.totalorder %s37, %s53
    %p55 = scmp.eq.s32.totalorder %s15, 0
    %p56 = por %p54, %p55
    %s57 = ssub.s32 %s16, %s28
    %p58 = scmp.eq.s32.totalorder %s57, 0
    %s60 = sadd.s32 %s59, 1
    %s61 = scalar_select %p58, %s59, %s60
    %p64 = pneg %p58
    %p65 = scmp.eq.s32.totalorder %s9, 1
    %p66 = por %p64, %p65
    %p67 = scmp.ne.s32.totalorder %s59, %s62
    %p68 = scmp.eq.s32.totalorder %s9, 0
    %p69 = por %p67, %p68
    %p70 = scmp.ne.s32.totalorder %s59, %s62
    %p71 = scmp.eq.s32.totalorder %s14, 1
    %p72 = por %p70, %p71
    %p73 = scmp.ne.s32.totalorder %s62, %s63
    %p74 = scmp.eq.s32.totalorder %s14, 0
    %p75 = por %p73, %p74
    %p76 = scmp.ne.s32.totalorder %s62, %s63
    %p77 = scmp.eq.s32.totalorder %s15, 1
    %p78 = por %p76, %p77
    %p80 = scmp.ne.s32.totalorder %s63, %s79
    %p81 = scmp.eq.s32.totalorder %s15, 0
    %p82 = por %p80, %p81
    %s83 = ssub.s32 %s16, %s28
    %p84 = scmp.eq.s32.totalorder %s83, 0
    %s86 = sadd.s32 %s85, 1
    %s87 = scalar_select %p84, %s85, %s86
    %p90 = pneg %p84
    %p91 = scmp.eq.s32.totalorder %s9, 1
    %p92 = por %p90, %p91
    %p93 = scmp.ne.s32.totalorder %s85, %s88
    %p94 = scmp.eq.s32.totalorder %s9, 0
    %p95 = por %p93, %p94
    %p96 = scmp.ne.s32.totalorder %s85, %s88
    %p97 = scmp.eq.s32.totalorder %s14, 1
    %p98 = por %p96, %p97
    %p99 = scmp.ne.s32.totalorder %s88, %s89
    %p100 = scmp.eq.s32.totalorder %s14, 0
    %p101 = por %p99, %p100
    %p102 = scmp.ne.s32.totalorder %s88, %s89
    %p103 = scmp.eq.s32.totalorder %s15, 1
    %p104 = por %p102, %p103
    %p106 = scmp.ne.s32.totalorder %s89, %s105
    %p107 = scmp.eq.s32.totalorder %s15, 0
    %p108 = por %p106, %p107
    %p109 = scmp.le.s32.totalorder 1, %s9
    %p110 = scmp.lt.s32.totalorder %s9, 3
    %p111 = pnand %p109, %p110
    %p112 = pneg %p111
    // Predicated region
    $region9: #{conditional_norm_forward.2} parent=5 // pred_check
      _
    $region10: #{conditional_norm_forward.2} parent=5 // pred_check_branch
      %114 = sbr.rel (%p111) target = $region12
    $region11: #{conditional_norm_forward.2} parent=5 // pred_region
      %s115 = ssub.s32 %s9, 1
    $region12: #{conditional_norm_forward.2} parent=5 // pred_fallthru
      _
    %p116 = scmp.lt.s32.totalorder %s9, 2
    // Predicated region
    $region13: #{conditional_norm_forward.2} parent=5 // pred_check
      %p117 = pneg %p116
    $region14: #{conditional_norm_forward.2} parent=5 // pred_check_branch
      %119 = sbr.rel (%p117) target = $region16
    $region15: #{conditional_norm_forward.2} parent=5 // pred_region
      // Predicated region
      $region17: #{conditional_norm_forward.2} parent=15 // pred_check
        %p120 = pneg %p43
      $region18: #{conditional_norm_forward.2} parent=15 // pred_check_branch
        %122 = sbr.rel (%p120) target = $region20
      $region19: #{conditional_norm_forward.2} parent=15 // pred_region
        %s123 = smul.u32 2, %s16
        %p124 = scmp.lt.s32.totalorder %s17, 1
        %s125 = scalar_select %p124, %s17, 1
        %p126 = scmp.lt.s32.totalorder %s123, 1
        %s127 = scalar_select %p126, %s123, 1
        %s128 = smul.addr %s125, 2
        %s129 = sadd.s32 %s127, %s128
        %s130 = smul.addr %s129, 4
        %s131 = scalar_lea.vmem %s0, %s130
        %s132 = smul.u32 2, %s16
      $region20: #{conditional_norm_forward.2} parent=15 // pred_fallthru
        _
    $region16: #{conditional_norm_forward.2} parent=5 // pred_fallthru
      _
    %p133 = scmp.le.s32.totalorder 1, %s9
    %p134 = scmp.lt.s32.totalorder %s9, 3
    %p135 = pnand %p133, %p134
    %p136 = pneg %p135
    // Predicated region
    $region21: #{conditional_norm_forward.2} parent=5 // pred_check
      _
    $region22: #{conditional_norm_forward.2} parent=5 // pred_check_branch
      %138 = sbr.rel (%p135) target = $region24
    $region23: #{conditional_norm_forward.2} parent=5 // pred_region
      %s139 = ssub.s32 %s9, 1
      %s140 = smul.u32 2, %s18
      %p141 = scmp.lt.s32.totalorder %s19, 1
      %s142 = scalar_select %p141, %s19, 1
      %p143 = scmp.lt.s32.totalorder %s140, 1
      %s144 = scalar_select %p143, %s140, 1
      %s145 = smul.addr %s142, 2
      %s146 = sadd.s32 %s144, %s145
      %s147 = smul.addr %s146, 4
      %s148 = scalar_lea.vmem %s0, %s147
      %p149 = pneg %p49
      %p150 = pneg %p46
      %p151 = pneg %p75
      %p152 = pneg %p72
      %p153 = scmp.lt.s32.totalorder %s18, 0
      %s154 = scalar_select %p153, %s18, 0
      %s155 = smul.addr %s154, 4
      %s156 = scalar_lea.vmem %s1, %s155
      %p157 = pneg %p101
      %p158 = pneg %p98
      %p159 = scmp.lt.s32.totalorder %s18, 0
      %s160 = scalar_select %p159, %s18, 0
      %s161 = smul.addr %s160, 4
      %s162 = scalar_lea.vmem %s2, %s161
      %s163 = smul.u32 2, %s18
      %p164 = scmp.lt.s32.totalorder %s19, 1
      %s165 = scalar_select %p164, %s19, 1
      %p166 = scmp.lt.s32.totalorder %s163, 1
      %s167 = scalar_select %p166, %s163, 1
      %s168 = smul.addr %s165, 2
      %s169 = sadd.s32 %s167, %s168
      %s170 = smul.addr %s169, 4
      %s171 = scalar_lea.vmem %s0, %s170
      %s172 = smul.u32 2, %s18
      %p173 = scmp.lt.s32.totalorder %s18, 0
      %s174 = scalar_select %p173, %s18, 0
      %s175 = smul.addr %s174, 4
      %s176 = scalar_lea.vmem %s1, %s175
      %p177 = scmp.lt.s32.totalorder %s18, 0
      %s178 = scalar_select %p177, %s18, 0
      %s179 = smul.addr %s178, 4
      %s180 = scalar_lea.vmem %s2, %s179
      %p181 = scmp.eq.s32.totalorder %s19, 0
      // Predicated region
      $region25: #{conditional_norm_forward.2} parent=23 // pred_check
        %p182 = pneg %p181
      $region26: #{conditional_norm_forward.2} parent=23 // pred_check_branch
        %184 = sbr.rel (%p182) target = $region28
      $region27: #{conditional_norm_forward.2} parent=23 // pred_region
        %vm185 = vcmask 3072
        %186 = vst.msk [vmem:[%s176] sm:$0xf] %vm185, 0.0
        %187 = vst.msk [vmem:[%s180] sm:$0xf] %vm185, 0.0
      $region28: #{conditional_norm_forward.2} parent=23 // pred_fallthru
        _
      %v188 = vld [vmem:[%s171] sm:$0xff]
      %v189 = vld [vmem:[%s176] sm:$0xf]
      %191 = vst [vmem:[#allocation1] ss:$2 sm:$0xff] %v188
      %v192 = vld.sshfl [vmem:[#allocation1] sm:$0xff pattern:$0x75316420]
      %v193 = vld.sshfl [vmem:[#allocation1 + $0x8] sm:$0xff pattern:$0x75316420]
      %vm196 = vcmask 1043456
      %v197 = vsel %vm196, %v192, 0.0
      %v198 = vsel %vm196, %v193, 0.0
      %v199 = vadd.f32 %v197, %v198
      %200 = vadd.xlane.f32.xlu0 %v199
      %v201 = vpop.xlane.xlu0 %200
      %v202 = vadd.f32 %v189, %v201
      %vm203 = vcmask 3072
      %204 = vst.msk [vmem:[%s176] sm:$0xf] %vm203, %v202
      %v205 = vld [vmem:[%s180] sm:$0xf]
      %v206 = vmul.f32 %v188, %v188
      %208 = vst [vmem:[#allocation1] ss:$2 sm:$0xff] %v206
      %v209 = vld.sshfl [vmem:[#allocation1] sm:$0xff pattern:$0x75316420]
      %v210 = vld.sshfl [vmem:[#allocation1 + $0x8] sm:$0xff pattern:$0x75316420]
      %v213 = vsel %vm196, %v209, 0.0
      %v214 = vsel %vm196, %v210, 0.0
      %v215 = vadd.f32 %v213, %v214
      %216 = vadd.xlane.f32.xlu0 %v215
      %v217 = vpop.xlane.xlu0 %216
      %v218 = vadd.f32 %v205, %v217
      %219 = vst.msk [vmem:[%s180] sm:$0xf] %vm203, %v218
      %p220 = scmp.lt.s32.totalorder %s18, 0
      %s221 = scalar_select %p220, %s18, 0
      %s222 = smul.addr %s221, 4
      %s223 = scalar_lea.vmem %s1, %s222
      %p224 = scmp.lt.s32.totalorder %s18, 0
      %s225 = scalar_select %p224, %s18, 0
      %s226 = smul.addr %s225, 4
      %s227 = scalar_lea.vmem %s2, %s226
      // Predicated region
      $region29: #{conditional_norm_forward.2} parent=23 // pred_check
        %p228 = pneg %p72
      $region30: #{conditional_norm_forward.2} parent=23 // pred_check_branch
        %230 = sbr.rel (%p228) target = $region32
      $region31: #{conditional_norm_forward.2} parent=23 // pred_region
        _
      $region32: #{conditional_norm_forward.2} parent=23 // pred_fallthru
        _
      // Predicated region
      $region33: #{conditional_norm_forward.2} parent=23 // pred_check
        %p231 = pneg %p98
      $region34: #{conditional_norm_forward.2} parent=23 // pred_check_branch
        %233 = sbr.rel (%p231) target = $region36
      $region35: #{conditional_norm_forward.2} parent=23 // pred_region
        _
      $region36: #{conditional_norm_forward.2} parent=23 // pred_fallthru
        _
      // Predicated region
      $region37: #{conditional_norm_forward.2} parent=23 // pred_check
        %p234 = pneg %p72
      $region38: #{conditional_norm_forward.2} parent=23 // pred_check_branch
        %236 = sbr.rel (%p234) target = $region40
      $region39: #{conditional_norm_forward.2} parent=23 // pred_region
        %p237 = scmp.lt.s32.totalorder %s18, 0
        %s238 = scalar_select %p237, %s18, 0
        %s239 = smul.addr %s238, 4
        %s240 = scalar_lea.vmem %s1, %s239
      $region40: #{conditional_norm_forward.2} parent=23 // pred_fallthru
        _
      // Predicated region
      $region41: #{conditional_norm_forward.2} parent=23 // pred_check
        %p241 = pneg %p98
      $region42: #{conditional_norm_forward.2} parent=23 // pred_check_branch
        %243 = sbr.rel (%p241) target = $region44
      $region43: #{conditional_norm_forward.2} parent=23 // pred_region
        %p244 = scmp.lt.s32.totalorder %s18, 0
        %s245 = scalar_select %p244, %s18, 0
        %s246 = smul.addr %s245, 4
        %s247 = scalar_lea.vmem %s2, %s246
      $region44: #{conditional_norm_forward.2} parent=23 // pred_fallthru
        _
    $region24: #{conditional_norm_forward.2} parent=5 // pred_fallthru
      _
    %p248 = scmp.le.s32.totalorder 2, %s9
    // Predicated region
    $region45: #{conditional_norm_forward.2} parent=5 // pred_check
      %p249 = pneg %p248
    $region46: #{conditional_norm_forward.2} parent=5 // pred_check_branch
      %251 = sbr.rel (%p249) target = $region48
    $region47: #{conditional_norm_forward.2} parent=5 // pred_region
      %s252 = ssub.s32 %s9, 2
    $region48: #{conditional_norm_forward.2} parent=5 // pred_fallthru
      _
  $region6: #{conditional_norm_forward.2} parent=0 // loop_footer
    %s13 = sadd.s32 1, %s9
  $region7: #{conditional_norm_forward.2} parent=0 // loop_footer_branch
    %8 = sbr.rel target = $region3
  $region8: #{conditional_norm_forward.2} parent=0 // loop_exit
    _

// kernel: conditional_norm_forward.3
$region0: #{conditional_norm_forward.3}
  #allocation0 [shape = 'u32[]', space=smem, size = 0x4, offset = 0x4, fixed_abs, tag = 'smem constant byte address 0x4 - core index']
  #allocation1 [shape = 'u32[72,128]{1,0:T(1,128)}', space=vmem, size = 0x9000, scoped, tag = 'internal scratch']
  %s0 = inlined_call_operand.vmem [shape: f32[4,4], index: 0, kind: input, shape index: {}]
  %s1 = inlined_call_operand.vmem [shape: f32[4,1], index: 1, kind: input, shape index: {}]
  %s2 = inlined_call_operand.vmem [shape: f32[2,4,256], index: 2, kind: input, shape index: {}]
  %s3 = inlined_call_operand.vmem [shape: f32[2,4,256], index: 3, kind: output, shape index: {}]
  %s4 = sld [smem:[#allocation0]]
  $region45: #{conditional_norm_forward.3} parent=0
    _
  %s6 = ssub.s32 1, %s4
  %s7 = scalar_select 0, %s6, %s4
  loop: start=0, step=1, limit=4
  $region2: #{conditional_norm_forward.3} parent=0 // loop_pre_header
    _
  $region3: #{conditional_norm_forward.3} parent=0 // loop_header
    %s9 = sphi 0, %s13
    %p10 = scmp.ge.s32.totalorder %s9, 4
    %s16 = sphi 0, %s28
    %s17 = sphi 0, %s24
    %s18 = sphi 0, %s16
    %s19 = sphi 0, %s17
    %s20 = sphi 0, %s18
    %s21 = sphi 0, %s19
    %s29 = sphi 0, %s29
    %s31 = sphi 0, %s29
    %s32 = sphi 0, %s31
    %s46 = sphi 0, %s32
    %s50 = sphi 0, %s50
    %s52 = sphi 0, %s50
    %s53 = sphi 0, %s52
    %s67 = sphi 0, %s53
    %s75 = sphi 0, %s77
    %s78 = sphi 0, %s75
    %s79 = sphi 0, %s78
    %s95 = sphi 0, %s79
    %s103 = sphi 0, %s105
    %s106 = sphi 0, %s103
    %s107 = sphi 0, %s106
    %s123 = sphi 0, %s107
  $region4: #{conditional_norm_forward.3} parent=0 // loop_header_branch
    %12 = sbr.rel (%p10) target = $region8
  $region5: #{conditional_norm_forward.3} parent=0 // loop_body
    %s14 = ssub.s32 %s9, 1
    %s15 = ssub.s32 %s9, 2
    %s22 = sadd.s32 1, %s17
    %p23 = scmp.ge.s32.totalorder %s22, 1
    %s24 = scalar_select %p23, 0, %s22
    %s25 = sadd.s32 1, %s16
    %s26 = scalar_select %p23, %s25, %s16
    %p27 = scmp.ge.s32.totalorder %s26, 2
    %s28 = scalar_select %p27, 0, %s26
    %s30 = sadd.s32 %s29, 1
    %p33 = scmp.eq.s32.totalorder %s9, 1
    %p34 = scmp.ne.s32.totalorder %s29, %s31
    %p35 = scmp.eq.s32.totalorder %s9, 0
    %p36 = por %p34, %p35
    %p37 = scmp.ne.s32.totalorder %s29, %s31
    %p38 = scmp.eq.s32.totalorder %s14, 1
    %p39 = por %p37, %p38
    %p40 = scmp.ne.s32.totalorder %s31, %s32
    %p41 = scmp.eq.s32.totalorder %s14, 0
    %p42 = por %p40, %p41
    %p43 = scmp.ne.s32.totalorder %s31, %s32
    %p44 = scmp.eq.s32.totalorder %s15, 1
    %p45 = por %p43, %p44
    %p47 = scmp.ne.s32.totalorder %s32, %s46
    %p48 = scmp.eq.s32.totalorder %s15, 0
    %p49 = por %p47, %p48
    %s51 = sadd.s32 %s50, 1
    %p54 = scmp.eq.s32.totalorder %s9, 1
    %p55 = scmp.ne.s32.totalorder %s50, %s52
    %p56 = scmp.eq.s32.totalorder %s9, 0
    %p57 = por %p55, %p56
    %p58 = scmp.ne.s32.totalorder %s50, %s52
    %p59 = scmp.eq.s32.totalorder %s14, 1
    %p60 = por %p58, %p59
    %p61 = scmp.ne.s32.totalorder %s52, %s53
    %p62 = scmp.eq.s32.totalorder %s14, 0
    %p63 = por %p61, %p62
    %p64 = scmp.ne.s32.totalorder %s52, %s53
    %p65 = scmp.eq.s32.totalorder %s15, 1
    %p66 = por %p64, %p65
    %p68 = scmp.ne.s32.totalorder %s53, %s67
    %p69 = scmp.eq.s32.totalorder %s15, 0
    %p70 = por %p68, %p69
    %s71 = ssub.s32 %s16, %s28
    %s72 = ssub.s32 %s17, %s24
    %s73 = sor.u32 %s71, %s72
    %p74 = scmp.eq.s32.totalorder %s73, 0
    %s76 = sadd.s32 %s75, 1
    %s77 = scalar_select %p74, %s75, %s76
    %p80 = pneg %p74
    %p81 = scmp.eq.s32.totalorder %s9, 1
    %p82 = por %p80, %p81
    %p83 = scmp.ne.s32.totalorder %s75, %s78
    %p84 = scmp.eq.s32.totalorder %s9, 0
    %p85 = por %p83, %p84
    %p86 = scmp.ne.s32.totalorder %s75, %s78
    %p87 = scmp.eq.s32.totalorder %s14, 1
    %p88 = por %p86, %p87
    %p89 = scmp.ne.s32.totalorder %s78, %s79
    %p90 = scmp.eq.s32.totalorder %s14, 0
    %p91 = por %p89, %p90
    %p92 = scmp.ne.s32.totalorder %s78, %s79
    %p93 = scmp.eq.s32.totalorder %s15, 1
    %p94 = por %p92, %p93
    %p96 = scmp.ne.s32.totalorder %s79, %s95
    %p97 = scmp.eq.s32.totalorder %s15, 0
    %p98 = por %p96, %p97
    %s99 = ssub.s32 %s16, %s28
    %s100 = ssub.s32 %s17, %s24
    %s101 = sor.u32 %s99, %s100
    %p102 = scmp.eq.s32.totalorder %s101, 0
    %s104 = sadd.s32 %s103, 1
    %s105 = scalar_select %p102, %s103, %s104
    %p108 = pneg %p102
    %p109 = scmp.eq.s32.totalorder %s9, 1
    %p110 = por %p108, %p109
    %p111 = scmp.ne.s32.totalorder %s103, %s106
    %p112 = scmp.eq.s32.totalorder %s9, 0
    %p113 = por %p111, %p112
    %p114 = scmp.ne.s32.totalorder %s103, %s106
    %p115 = scmp.eq.s32.totalorder %s14, 1
    %p116 = por %p114, %p115
    %p117 = scmp.ne.s32.totalorder %s106, %s107
    %p118 = scmp.eq.s32.totalorder %s14, 0
    %p119 = por %p117, %p118
    %p120 = scmp.ne.s32.totalorder %s106, %s107
    %p121 = scmp.eq.s32.totalorder %s15, 1
    %p122 = por %p120, %p121
    %p124 = scmp.ne.s32.totalorder %s107, %s123
    %p125 = scmp.eq.s32.totalorder %s15, 0
    %p126 = por %p124, %p125
    %p127 = scmp.le.s32.totalorder 1, %s9
    %p128 = scmp.lt.s32.totalorder %s9, 3
    %p129 = pnand %p127, %p128
    %p130 = pneg %p129
    // Predicated region
    $region9: #{conditional_norm_forward.3} parent=5 // pred_check
      _
    $region10: #{conditional_norm_forward.3} parent=5 // pred_check_branch
      %132 = sbr.rel (%p129) target = $region12
    $region11: #{conditional_norm_forward.3} parent=5 // pred_region
      %s133 = ssub.s32 %s9, 1
      // Predicated region
      $region13: #{conditional_norm_forward.3} parent=11 // pred_check
        %p134 = pneg %p42
      $region14: #{conditional_norm_forward.3} parent=11 // pred_check_branch
        %136 = sbr.rel (%p134) target = $region16
      $region15: #{conditional_norm_forward.3} parent=11 // pred_region
        _
      $region16: #{conditional_norm_forward.3} parent=11 // pred_fallthru
        _
      // Predicated region
      $region17: #{conditional_norm_forward.3} parent=11 // pred_check
        %p137 = pneg %p63
      $region18: #{conditional_norm_forward.3} parent=11 // pred_check_branch
        %139 = sbr.rel (%p137) target = $region20
      $region19: #{conditional_norm_forward.3} parent=11 // pred_region
        _
      $region20: #{conditional_norm_forward.3} parent=11 // pred_fallthru
        _
    $region12: #{conditional_norm_forward.3} parent=5 // pred_fallthru
      _
    %p140 = scmp.lt.s32.totalorder %s9, 2
    // Predicated region
    $region21: #{conditional_norm_forward.3} parent=5 // pred_check
      %p141 = pneg %p140
    $region22: #{conditional_norm_forward.3} parent=5 // pred_check_branch
      %143 = sbr.rel (%p141) target = $region24
    $region23: #{conditional_norm_forward.3} parent=5 // pred_region
      // Predicated region
      $region25: #{conditional_norm_forward.3} parent=23 // pred_check
        %p144 = pneg %p85
      $region26: #{conditional_norm_forward.3} parent=23 // pred_check_branch
        %146 = sbr.rel (%p144) target = $region28
      $region27: #{conditional_norm_forward.3} parent=23 // pred_region
        %s147 = smul.u32 2, %s17
        %p148 = scmp.lt.s32.totalorder %s16, 1
        %s149 = scalar_select %p148, %s16, 1
        %p150 = scmp.lt.s32.totalorder %s147, 1
        %s151 = scalar_select %p150, %s147, 1
        %s152 = smul.addr %s149, 2
        %s153 = sadd.s32 %s151, %s152
        %s154 = smul.addr %s153, 4
        %s155 = scalar_lea.vmem %s2, %s154
        %s156 = smul.u32 2, %s17
      $region28: #{conditional_norm_forward.3} parent=23 // pred_fallthru
        _
    $region24: #{conditional_norm_forward.3} parent=5 // pred_fallthru
      _
    %p157 = scmp.le.s32.totalorder 1, %s9
    %p158 = scmp.lt.s32.totalorder %s9, 3
    %p159 = pnand %p157, %p158
    %p160 = pneg %p159
    // Predicated region
    $region29: #{conditional_norm_forward.3} parent=5 // pred_check
      _
    $region30: #{conditional_norm_forward.3} parent=5 // pred_check_branch
      %162 = sbr.rel (%p159) target = $region32
    $region31: #{conditional_norm_forward.3} parent=5 // pred_region
      %s163 = ssub.s32 %s9, 1
      %p164 = pneg %p42
      %p165 = pneg %p39
      %p166 = pneg %p63
      %p167 = pneg %p60
      %s168 = smul.u32 2, %s19
      %p169 = scmp.lt.s32.totalorder %s18, 1
      %s170 = scalar_select %p169, %s18, 1
      %p171 = scmp.lt.s32.totalorder %s168, 1
      %s172 = scalar_select %p171, %s168, 1
      %s173 = smul.addr %s170, 2
      %s174 = sadd.s32 %s172, %s173
      %s175 = smul.addr %s174, 4
      %s176 = scalar_lea.vmem %s2, %s175
      %p177 = pneg %p91
      %p178 = pneg %p88
      %p179 = pneg %p119
      %p180 = pneg %p116
      %s181 = smul.u32 2, %s19
      %p182 = scmp.lt.s32.totalorder %s18, 1
      %s183 = scalar_select %p182, %s18, 1
      %p184 = scmp.lt.s32.totalorder %s181, 1
      %s185 = scalar_select %p184, %s181, 1
      %s186 = smul.addr %s183, 2
      %s187 = sadd.s32 %s185, %s186
      %s188 = smul.addr %s187, 4
      %s189 = scalar_lea.vmem %s3, %s188
      %s190 = smul.u32 2, %s19
      %p191 = scmp.lt.s32.totalorder %s18, 1
      %s192 = scalar_select %p191, %s18, 1
      %p193 = scmp.lt.s32.totalorder %s190, 1
      %s194 = scalar_select %p193, %s190, 1
      %s195 = smul.addr %s192, 2
      %s196 = sadd.s32 %s194, %s195
      %s197 = smul.addr %s196, 4
      %s198 = scalar_lea.vmem %s2, %s197
      %s199 = smul.u32 2, %s19
      %s200 = smul.u32 2, %s19
      %p201 = scmp.lt.s32.totalorder %s18, 1
      %s202 = scalar_select %p201, %s18, 1
      %p203 = scmp.lt.s32.totalorder %s200, 1
      %s204 = scalar_select %p203, %s200, 1
      %s205 = smul.addr %s202, 2
      %s206 = sadd.s32 %s204, %s205
      %s207 = smul.addr %s206, 4
      %s208 = scalar_lea.vmem %s3, %s207
      %s209 = smul.u32 2, %s19
      %v210 = vld [vmem:[%s198] sm:$0xff]
      %v211 = vld [vmem:[%s0] sm:$0xf]
      %v212 = vld [vmem:[%s1] sm:$0xf]
      %214 = vset.pattern.permute.xlu0 0
      %215 = vperm.xlu0 %214, %v212
      %v216 = vpop.permute.xlu0 %215
      %219 = vset.pattern.permute.xlu0 0
      %220 = vperm.xlu0 %219, %v211
      %v221 = vpop.permute.xlu0 %220
      %v224 = vperm.slane %v210, 0
      %v225 = vperm.slane %v210, 4
      %v228 = vperm.slane %v224, 0
      %v229 = vperm.slane %v225, 0
      %v230 = vmul.f32 %v221, %v228
      %v231 = vmul.f32 %v221, %v229
      %v232 = vadd.f32 %v216, %v230
      %v233 = vadd.f32 %v216, %v231
      %234 = vset.pattern.permute.xlu0 1
      %235 = vperm.xlu0 %234, %v211
      %v236 = vpop.permute.xlu0 %235
      %v238 = vperm.slane %v210, 1
      %v239 = vperm.slane %v210, 5
      %v242 = vperm.slane %v238, 1
      %v243 = vperm.slane %v239, 1
      %v244 = vmul.f32 %v236, %v242
      %v245 = vmul.f32 %v236, %v243
      %v246 = vadd.f32 %v232, %v244
      %v247 = vadd.f32 %v233, %v245
      %248 = vset.pattern.permute.xlu0 2
      %249 = vperm.xlu0 %248, %v211
      %v250 = vpop.permute.xlu0 %249
      %v252 = vperm.slane %v210, 2
      %v253 = vperm.slane %v210, 6
      %v256 = vperm.slane %v252, 2
      %v257 = vperm.slane %v253, 2
      %v258 = vmul.f32 %v250, %v256
      %v259 = vmul.f32 %v250, %v257
      %v260 = vadd.f32 %v246, %v258
      %v261 = vadd.f32 %v247, %v259
      %262 = vset.pattern.permute.xlu0 3
      %263 = vperm.xlu0 %262, %v211
      %v264 = vpop.permute.xlu0 %263
      %v266 = vperm.slane %v210, 3
      %v267 = vperm.slane %v210, 7
      %v270 = vperm.slane %v266, 3
      %v271 = vperm.slane %v267, 3
      %v272 = vmul.f32 %v264, %v270
      %v273 = vmul.f32 %v264, %v271
      %v274 = vadd.f32 %v260, %v272
      %v275 = vadd.f32 %v261, %v273
      %v278 = vrot.slane %v275, 4
      %vm279 = vcmask 1043456
      %v280 = vsel %vm279, %v274, %v278
      %282 = vst [vmem:[%s208] sm:$0xff] %v280
      %s283 = smul.u32 2, %s19
      %p284 = scmp.lt.s32.totalorder %s18, 1
      %s285 = scalar_select %p284, %s18, 1
      %p286 = scmp.lt.s32.totalorder %s283, 1
      %s287 = scalar_select %p286, %s283, 1
      %s288 = smul.addr %s285, 2
      %s289 = sadd.s32 %s287, %s288
      %s290 = smul.addr %s289, 4
      %s291 = scalar_lea.vmem %s3, %s290
      // Predicated region
      $region33: #{conditional_norm_forward.3} parent=31 // pred_check
        %p292 = pneg %p116
      $region34: #{conditional_norm_forward.3} parent=31 // pred_check_branch
        %294 = sbr.rel (%p292) target = $region36
      $region35: #{conditional_norm_forward.3} parent=31 // pred_region
        %s295 = smul.u32 2, %s19
      $region36: #{conditional_norm_forward.3} parent=31 // pred_fallthru
        _
    $region32: #{conditional_norm_forward.3} parent=5 // pred_fallthru
      _
    %p296 = scmp.le.s32.totalorder 2, %s9
    // Predicated region
    $region37: #{conditional_norm_forward.3} parent=5 // pred_check
      %p297 = pneg %p296
    $region38: #{conditional_norm_forward.3} parent=5 // pred_check_branch
      %299 = sbr.rel (%p297) target = $region40
    $region39: #{conditional_norm_forward.3} parent=5 // pred_region
      %s300 = ssub.s32 %s9, 2
      // Predicated region
      $region41: #{conditional_norm_forward.3} parent=39 // pred_check
        %p301 = pneg %p122
      $region42: #{conditional_norm_forward.3} parent=39 // pred_check_branch
        %303 = sbr.rel (%p301) target = $region44
      $region43: #{conditional_norm_forward.3} parent=39 // pred_region
        %s304 = smul.u32 2, %s21
        %p305 = scmp.lt.s32.totalorder %s20, 1
        %s306 = scalar_select %p305, %s20, 1
        %p307 = scmp.lt.s32.totalorder %s304, 1
        %s308 = scalar_select %p307, %s304, 1
        %s309 = smul.addr %s306, 2
        %s310 = sadd.s32 %s308, %s309
        %s311 = smul.addr %s310, 4
        %s312 = scalar_lea.vmem %s3, %s311
      $region44: #{conditional_norm_forward.3} parent=39 // pred_fallthru
        _
    $region40: #{conditional_norm_forward.3} parent=5 // pred_fallthru
      _
  $region6: #{conditional_norm_forward.3} parent=0 // loop_footer
    %s13 = sadd.s32 1, %s9
  $region7: #{conditional_norm_forward.3} parent=0 // loop_footer_branch
    %8 = sbr.rel target = $region3
  $region8: #{conditional_norm_forward.3} parent=0 // loop_exit
    _

</llo_original>
